<compile_context>
chip_gen: v7x
topology: tpu7x:2x2x1
jax: 0.10.0
libtpu: 0.0.40
codegen_flags: <defaults>
</compile_context>

<pallas_src>
import jax
import jax.numpy as jnp
from jax.experimental import pallas as pl
from jax.experimental.pallas import tpu as pltpu

EPS = 1e-5


def _skip_block_kernel(x_ref, cs_ref, xr_ref, w_ref, g_ref, b_ref, o_ref):
    # x_ref : (N, D)       full-batch LHS in the MXU feed dtype (resident, single-buffered)
    # cs_ref: (1, D)       precomputed column sums of x (MXU feed dtype, resident)
    # xr_ref: (N, TILE_D)  f32 column block of x for the residual add
    # w_ref : (D, TILE_D)  weight column block (MXU feed dtype)
    # g_ref : (1, TILE_D)  gamma (f32)
    # b_ref : (1, TILE_D)  beta  (f32)
    n = x_ref.shape[0]
    inv_n = jnp.float32(1.0 / n)

    w = w_ref[...]
    # Main matmul on the MXU, f32 accumulation.
    h = jnp.dot(x_ref[...], w, preferred_element_type=jnp.float32)        # (N, TILE_D) f32

    # Batch mean via the precomputed column-sum row: sum_n (x@W)[n,:] == colsum(x) @ W.
    # One (1,D)x(D,TILE_D) matvec instead of a ones(1,N) @ h matmul per tile.
    sum_h = jnp.dot(cs_ref[...], w, preferred_element_type=jnp.float32)   # (1, TILE_D)
    mean = sum_h * inv_n

    # Exact-centred (two-pass) biased variance, MXU-routed batch reduction, all f32.
    hc = h - mean                                                          # (N, TILE_D)
    ones_row = jnp.ones((1, n), dtype=jnp.float32)
    var = jnp.dot(ones_row, hc * hc, preferred_element_type=jnp.float32) * inv_n

    # BN affine folded into one scale; hn = (h - mean) * (gamma * rsqrt(var+eps)) + beta.
    scale = g_ref[...] * jax.lax.rsqrt(var + EPS)                          # (1, TILE_D)
    hn = hc * scale + b_ref[...]                                           # (N, TILE_D)

    # ReLU + skip connection (residual from the f32 column block of x).
    o_ref[...] = (xr_ref[...] + jnp.maximum(hn, 0.0)).astype(o_ref.dtype)


def skip_connection_block(x, w, gamma, beta, *, tile_d=256, mxu_dtype=jnp.bfloat16):
    N, D = x.shape
    assert w.shape == (D, D), "skip connection requires in_dim == out_dim"
    tile_d = min(tile_d, D)
    assert D % tile_d == 0 and tile_d % 128 == 0, "feature tiles must stay lane-dense"
    assert N % 8 == 0, "batch dim must stay sublane-aligned"

    num_tiles = D // tile_d
    # Deepen the W pipeline only when the grid is long enough to benefit.
    w_buffers = 3 if num_tiles >= 3 else 2

    x_mxu = x.astype(mxu_dtype)
    w_mxu = w.astype(mxu_dtype)
    cs = jnp.sum(x, axis=0, keepdims=True).astype(mxu_dtype)   # (1, D) column sums of x
    g2 = gamma.reshape(1, D).astype(jnp.float32)
    b2 = beta.reshape(1, D).astype(jnp.float32)

    isz = jnp.dtype(mxu_dtype).itemsize
    osz = jnp.dtype(x.dtype).itemsize
    vmem_need = (
        N * D * isz                         # x (resident, single-buffered)
        + D * isz                           # column-sum row (resident)
        + w_buffers * D * tile_d * isz      # W column blocks
        + 2 * N * tile_d * osz              # residual x column blocks (double-buffered)
        + 2 * N * tile_d * osz              # output blocks (double-buffered)
        + 4 * tile_d * 4                    # gamma / beta blocks
    )
    vmem_limit = int(min(max(vmem_need * 5 // 4 + (1 << 20), 32 << 20), 96 << 20))

    cost = pl.CostEstimate(
        flops=2 * N * D * D        # main matmul
        + 2 * D * D                # mean matvecs (all tiles)
        + 2 * N * D                # variance reductions (all tiles)
        + 6 * N * D,               # center / scale / relu / residual
        transcendentals=D,         # rsqrt per feature
        bytes_accessed=(N * D * isz + D * isz + D * D * isz
                        + N * D * osz + N * D * osz + 2 * D * 4),
    )

    return pl.pallas_call(
        _skip_block_kernel,
        out_shape=jax.ShapeDtypeStruct((N, D), x.dtype),
        grid_spec=pltpu.PrefetchScalarGridSpec(
            num_scalar_prefetch=0,
            grid=(num_tiles,),
            in_specs=[
                pl.BlockSpec((N, D), lambda j: (0, 0),
                             pipeline_mode=pl.Buffered(1)),            # x: constant index
                pl.BlockSpec((1, D), lambda j: (0, 0),
                             pipeline_mode=pl.Buffered(1)),            # colsum(x): constant index
                pl.BlockSpec((N, tile_d), lambda j: (0, j)),           # residual x column block
                pl.BlockSpec((D, tile_d), lambda j: (0, j),
                             pipeline_mode=pl.Buffered(w_buffers)),    # W column block
                pl.BlockSpec((1, tile_d), lambda j: (0, j)),           # gamma
                pl.BlockSpec((1, tile_d), lambda j: (0, j)),           # beta
            ],
            out_specs=pl.BlockSpec((N, tile_d), lambda j: (0, j)),
        ),
        compiler_params=pltpu.CompilerParams(
            dimension_semantics=("parallel",),                          # megacore-shard D tiles
            vmem_limit_bytes=vmem_limit,
        ),
        cost_estimate=cost,
    )(x_mxu, cs, x, w_mxu, g2, b2)


def reference(x, w, gamma, beta):
    h = x @ w
    mean = h.mean(axis=0, keepdims=True)
    var = ((h - mean) ** 2).mean(axis=0, keepdims=True)   # biased, train-mode BN
    hn = (h - mean) / jnp.sqrt(var + EPS) * gamma + beta
    return x + jnp.maximum(hn, 0.0)


if __name__ == "__main__":
    # Small lane-dense shapes: N multiple of 8, D multiple of 128 (two 256-wide tiles).
    N, D = 64, 512
    key = jax.random.PRNGKey(0)
    kx, kw = jax.random.split(key)

    x = jax.random.normal(kx, (N, D), dtype=jnp.float32)
    # Linear(in_dim, out_dim, bias=False) weight stored as (in_dim, out_dim).
    bound = 1.0 / jnp.sqrt(jnp.float32(D))
    w = jax.random.uniform(kw, (D, D), dtype=jnp.float32, minval=-bound, maxval=bound)
    # BatchNorm1d default affine params.
    gamma = jnp.ones((D,), dtype=jnp.float32)
    beta = jnp.zeros((D,), dtype=jnp.float32)

    ref = reference(x, w, gamma, beta)

    # Exact f32 MXU path: tight tolerance against the f32 reference.
    out_f32 = jax.block_until_ready(
        skip_connection_block(x, w, gamma, beta, mxu_dtype=jnp.float32))
    assert jnp.allclose(out_f32, ref, atol=1e-4, rtol=1e-4), "f32 path mismatch vs reference"

    # Default fast path: bf16 MXU feeds (f32 accumulation / stats / residual).
    out_bf16 = jax.block_until_ready(skip_connection_block(x, w, gamma, beta))
    assert jnp.allclose(out_bf16, ref, atol=5e-2, rtol=5e-2), "bf16 path mismatch vs reference"

    print("KERNEL_OK")
</pallas_src>

<mosaic_0001>
module attributes {stable_mosaic.version = 11 : i64} {
  func.func @_skip_block_kernel(%arg0: i32, %arg1: memref<64x512xf32, #tpu.memory_space<vmem>>, %arg2: memref<1x512xf32, #tpu.memory_space<vmem>>, %arg3: memref<64x256xf32, #tpu.memory_space<vmem>>, %arg4: memref<512x256xf32, #tpu.memory_space<vmem>>, %arg5: memref<1x256xf32, #tpu.memory_space<vmem>>, %arg6: memref<1x256xf32, #tpu.memory_space<vmem>>, %arg7: memref<64x256xf32, #tpu.memory_space<vmem>>) attributes {dimension_semantics = [#tpu.dimension_semantics<parallel>], iteration_bounds = array<i64: 2>, scalar_prefetch = 0 : i64, scratch_operands = 0 : i64, tpu.core_type = #tpu.core_type<tc>, window_params = [{pipeline_mode = #tpu.pipeline_mode<synchronous>, transform_indices = @transform_0, window_bounds = array<i64: 64, 512>}, {pipeline_mode = #tpu.pipeline_mode<synchronous>, transform_indices = @transform_1, window_bounds = array<i64: 1, 512>}, {transform_indices = @transform_2, window_bounds = array<i64: 64, 256>}, {pipeline_mode = #tpu.pipeline_mode<double_buffered>, transform_indices = @transform_3, window_bounds = array<i64: 512, 256>}, {transform_indices = @transform_4, window_bounds = array<i64: 1, 256>}, {transform_indices = @transform_5, window_bounds = array<i64: 1, 256>}, {transform_indices = @transform_6, window_bounds = array<i64: 64, 256>}]} {
    %c0 = arith.constant 0 : index
    %c0_0 = arith.constant 0 : index
    %0 = vector.load %arg4[%c0, %c0_0] : memref<512x256xf32, #tpu.memory_space<vmem>>, vector<512x256xf32>
    %c0_1 = arith.constant 0 : index
    %c0_2 = arith.constant 0 : index
    %1 = vector.load %arg1[%c0_1, %c0_2] : memref<64x512xf32, #tpu.memory_space<vmem>>, vector<64x512xf32>
    %cst = arith.constant dense<0.000000e+00> : vector<64x256xf32>
    %2 = tpu.matmul %1, %0, %cst {dimension_numbers = #tpu.dot_dimension_numbers<[1], [0], [0], [1], [0, 0, 1, 1], [], []>} : vector<64x512xf32>, vector<512x256xf32>, vector<64x256xf32> -> vector<64x256xf32>
    %c0_3 = arith.constant 0 : index
    %c0_4 = arith.constant 0 : index
    %3 = vector.load %arg2[%c0_3, %c0_4] : memref<1x512xf32, #tpu.memory_space<vmem>>, vector<1x512xf32>
    %cst_5 = arith.constant dense<0.000000e+00> : vector<1x256xf32>
    %4 = tpu.matmul %3, %0, %cst_5 {dimension_numbers = #tpu.dot_dimension_numbers<[1], [0], [0], [1], [0, 0, 1, 1], [], []>} : vector<1x512xf32>, vector<512x256xf32>, vector<1x256xf32> -> vector<1x256xf32>
    %cst_6 = arith.constant 1.562500e-02 : f32
    %5 = vector.broadcast %cst_6 : f32 to vector<1x256xf32>
    %6 = arith.mulf %4, %5 : vector<1x256xf32>
    %7 = vector.broadcast %6 : vector<1x256xf32> to vector<64x256xf32>
    %8 = arith.subf %2, %7 : vector<64x256xf32>
    %cst_7 = arith.constant 1.000000e+00 : f32
    %9 = vector.broadcast %cst_7 : f32 to vector<1x64xf32>
    %10 = arith.mulf %8, %8 : vector<64x256xf32>
    %cst_8 = arith.constant dense<0.000000e+00> : vector<1x256xf32>
    %11 = tpu.matmul %9, %10, %cst_8 {dimension_numbers = #tpu.dot_dimension_numbers<[1], [0], [0], [1], [0, 0, 1, 1], [], []>} : vector<1x64xf32>, vector<64x256xf32>, vector<1x256xf32> -> vector<1x256xf32>
    %cst_9 = arith.constant 1.562500e-02 : f32
    %12 = vector.broadcast %cst_9 : f32 to vector<1x256xf32>
    %13 = arith.mulf %11, %12 : vector<1x256xf32>
    %c0_10 = arith.constant 0 : index
    %c0_11 = arith.constant 0 : index
    %14 = vector.load %arg5[%c0_10, %c0_11] : memref<1x256xf32, #tpu.memory_space<vmem>>, vector<1x256xf32>
    %cst_12 = arith.constant 9.99999974E-6 : f32
    %15 = vector.broadcast %cst_12 : f32 to vector<1x256xf32>
    %16 = arith.addf %13, %15 : vector<1x256xf32>
    %17 = math.rsqrt %16 : vector<1x256xf32>
    %18 = arith.mulf %14, %17 : vector<1x256xf32>
    %19 = vector.broadcast %18 : vector<1x256xf32> to vector<64x256xf32>
    %20 = arith.mulf %8, %19 : vector<64x256xf32>
    %c0_13 = arith.constant 0 : index
    %c0_14 = arith.constant 0 : index
    %21 = vector.load %arg6[%c0_13, %c0_14] : memref<1x256xf32, #tpu.memory_space<vmem>>, vector<1x256xf32>
    %22 = vector.broadcast %21 : vector<1x256xf32> to vector<64x256xf32>
    %23 = arith.addf %20, %22 : vector<64x256xf32>
    %c0_15 = arith.constant 0 : index
    %c0_16 = arith.constant 0 : index
    %24 = vector.load %arg3[%c0_15, %c0_16] : memref<64x256xf32, #tpu.memory_space<vmem>>, vector<64x256xf32>
    %cst_17 = arith.constant 0.000000e+00 : f32
    %25 = vector.broadcast %cst_17 : f32 to vector<64x256xf32>
    %26 = arith.maximumf %23, %25 : vector<64x256xf32>
    %27 = arith.addf %24, %26 : vector<64x256xf32>
    %c0_18 = arith.constant 0 : index
    %c0_19 = arith.constant 0 : index
    %28 = vector.load %arg7[%c0_18, %c0_19] : memref<64x256xf32, #tpu.memory_space<vmem>>, vector<64x256xf32>
    tpu.vector_store %arg7[%c0_18, %c0_19], %27 {strides = array<i32>} : memref<64x256xf32, #tpu.memory_space<vmem>>, vector<64x256xf32>,
    return
  }
  func.func @transform_0(%arg0: i32) -> (i32, i32) {
    %c0_i32 = arith.constant 0 : i32
    %c0_i32_0 = arith.constant 0 : i32
    %c0_i32_1 = arith.constant 0 : i32
    return %c0_i32, %c0_i32_0 : i32, i32
  }
  func.func @transform_1(%arg0: i32) -> (i32, i32) {
    %c0_i32 = arith.constant 0 : i32
    %c0_i32_0 = arith.constant 0 : i32
    %c0_i32_1 = arith.constant 0 : i32
    return %c0_i32, %c0_i32_0 : i32, i32
  }
  func.func @transform_2(%arg0: i32) -> (i32, i32) {
    %c0_i32 = arith.constant 0 : i32
    %c0_i32_0 = arith.constant 0 : i32
    return %c0_i32, %arg0 : i32, i32
  }
  func.func @transform_3(%arg0: i32) -> (i32, i32) {
    %c0_i32 = arith.constant 0 : i32
    %c0_i32_0 = arith.constant 0 : i32
    return %c0_i32, %arg0 : i32, i32
  }
  func.func @transform_4(%arg0: i32) -> (i32, i32) {
    %c0_i32 = arith.constant 0 : i32
    %c0_i32_0 = arith.constant 0 : i32
    return %c0_i32, %arg0 : i32, i32
  }
  func.func @transform_5(%arg0: i32) -> (i32, i32) {
    %c0_i32 = arith.constant 0 : i32
    %c0_i32_0 = arith.constant 0 : i32
    return %c0_i32, %arg0 : i32, i32
  }
  func.func @transform_6(%arg0: i32) -> (i32, i32) {
    %c0_i32 = arith.constant 0 : i32
    %c0_i32_0 = arith.constant 0 : i32
    return %c0_i32, %arg0 : i32, i32
  }
}

</mosaic_0001>

<llo_original>
// kernel: tpu_custom_call.1
$region0: #{tpu_custom_call.1}
  #allocation0 [shape = 'u32[]', space=smem, size = 0x4, offset = 0x4, fixed_abs, tag = 'smem constant byte address 0x4 - core index']
  #allocation1 [shape = 'u32[144,128]{1,0:T(1,128)}', space=vmem, size = 0x12000, scoped, tag = 'internal scratch']
  %s0 = inlined_call_operand.hbm [shape: f32[64,512], index: 0, kind: input, shape index: {}]
  %s1 = inlined_call_operand.hbm [shape: f32[1,512], index: 1, kind: input, shape index: {}]
  %s2 = inlined_call_operand.hbm [shape: f32[64,512], index: 2, kind: input, shape index: {}]
  %s3 = inlined_call_operand.hbm [shape: f32[512,512], index: 3, kind: input, shape index: {}]
  %s4 = inlined_call_operand.vmem [shape: f32[1,512], index: 4, kind: input, shape index: {}]
  %s5 = inlined_call_operand.vmem [shape: f32[1,512], index: 5, kind: input, shape index: {}]
  %s6 = inlined_call_operand.hbm [shape: f32[64,512], index: 6, kind: output, shape index: {}]
  %s7 = sld [smem:[#allocation0]]
  $region73: #{tpu_custom_call.1} parent=0
    _
  %s9 = ssub.s32 1, %s7
  %s10 = scalar_select 0, %s9, %s7
  $region1: #{tpu_custom_call.1} parent=0
    #allocation2 [shape = 'u8[131072]{0}', space=vmem, size = 0x20000, scoped, tag = 'input window, operand 0, single buffered']
    #allocation3 [shape = 's32[2]{0}', space=sflag, size = 0x8, scoped, tag = 'scoped memory for tpu_custom_call.1']
    #allocation4 [shape = 's32[2]{0}', space=sflag, size = 0x8, scoped, tag = 'scoped memory for tpu_custom_call.1']
    #allocation5 [shape = 'u8[2048]{0}', space=vmem, size = 0x800, scoped, tag = 'input window, operand 1, single buffered']
    #allocation6 [shape = 's32[1]{0}', space=sflag, size = 0x4, scoped, tag = 'scoped memory for tpu_custom_call.1']
    #allocation7 [shape = 'u8[131072]{0}', space=vmem, size = 0x20000, scoped, tag = 'input window, operand 2']
    #allocation8 [shape = 'u8[1048576]{0}', space=vmem, size = 0x100000, scoped, tag = 'input window, operand 3']
    #allocation9 [shape = 'u8[131072]{0}', space=vmem, size = 0x20000, scoped, tag = 'output window, operand 0']
    %11 = vsyncpa [#allocation3], 0
    %12 = vsyncpa [#allocation6], 0
    %13 = vsyncpa [#allocation4], 0
    %s14 = scalar_lea.sflag [#allocation4], 1
    %15 = vsyncpa %s14, 0
    loop: start=0, step=1, limit=4
    $region2: #{tpu_custom_call.1} parent=1 // loop_pre_header
      _
    $region3: #{tpu_custom_call.1} parent=1 // loop_header
      %s17 = sphi 0, %s21
      %p18 = scmp.ge.s32.totalorder %s17, 4
      %s25 = sphi 0, %s25
      %s27 = sphi 0, %s25
      %s28 = sphi 0, %s27
      %s42 = sphi 0, %s28
      %s46 = sphi 0, %s46
      %s48 = sphi 0, %s46
      %s49 = sphi 0, %s48
      %s63 = sphi 0, %s49
      %s69 = sphi 0, %s71
      %s72 = sphi 0, %s69
      %s73 = sphi 0, %s72
      %s89 = sphi 0, %s73
      %s95 = sphi 0, %s97
      %s98 = sphi 0, %s95
      %s99 = sphi 0, %s98
      %s115 = sphi 0, %s99
      %s121 = sphi 0, %s123
      %s124 = sphi 0, %s121
      %s125 = sphi 0, %s124
      %s141 = sphi 0, %s125
      %s147 = sphi 0, %s149
      %s150 = sphi 0, %s147
      %s151 = sphi 0, %s150
      %s167 = sphi 0, %s151
      %s173 = sphi 0, %s175
      %s176 = sphi 0, %s173
      %s177 = sphi 0, %s176
      %s193 = sphi 0, %s177
    $region4: #{tpu_custom_call.1} parent=1 // loop_header_branch
      %20 = sbr.rel (%p18) target = $region8
    $region5: #{tpu_custom_call.1} parent=1 // loop_body
      %s22 = ssub.s32 %s17, 1
      %s23 = ssub.s32 %s17, 2
      %s24 = sadd.s32 %s17, 1
      %s26 = sadd.s32 %s25, 1
      %p29 = scmp.eq.s32.totalorder %s17, 1
      %p30 = scmp.ne.s32.totalorder %s25, %s27
      %p31 = scmp.eq.s32.totalorder %s17, 0
      %p32 = por %p30, %p31
      %p33 = scmp.ne.s32.totalorder %s25, %s27
      %p34 = scmp.eq.s32.totalorder %s22, 1
      %p35 = por %p33, %p34
      %p36 = scmp.ne.s32.totalorder %s27, %s28
      %p37 = scmp.eq.s32.totalorder %s22, 0
      %p38 = por %p36, %p37
      %p39 = scmp.ne.s32.totalorder %s27, %s28
      %p40 = scmp.eq.s32.totalorder %s23, 1
      %p41 = por %p39, %p40
      %p43 = scmp.ne.s32.totalorder %s28, %s42
      %p44 = scmp.eq.s32.totalorder %s23, 0
      %p45 = por %p43, %p44
      %s47 = sadd.s32 %s46, 1
      %p50 = scmp.eq.s32.totalorder %s17, 1
      %p51 = scmp.ne.s32.totalorder %s46, %s48
      %p52 = scmp.eq.s32.totalorder %s17, 0
      %p53 = por %p51, %p52
      %p54 = scmp.ne.s32.totalorder %s46, %s48
      %p55 = scmp.eq.s32.totalorder %s22, 1
      %p56 = por %p54, %p55
      %p57 = scmp.ne.s32.totalorder %s48, %s49
      %p58 = scmp.eq.s32.totalorder %s22, 0
      %p59 = por %p57, %p58
      %p60 = scmp.ne.s32.totalorder %s48, %s49
      %p61 = scmp.eq.s32.totalorder %s23, 1
      %p62 = por %p60, %p61
      %p64 = scmp.ne.s32.totalorder %s49, %s63
      %p65 = scmp.eq.s32.totalorder %s23, 0
      %p66 = por %p64, %p65
      %s67 = ssub.s32 %s17, %s24
      %p68 = scmp.eq.s32.totalorder %s67, 0
      %s70 = sadd.s32 %s69, 1
      %s71 = scalar_select %p68, %s69, %s70
      %p74 = pneg %p68
      %p75 = scmp.eq.s32.totalorder %s17, 1
      %p76 = por %p74, %p75
      %p77 = scmp.ne.s32.totalorder %s69, %s72
      %p78 = scmp.eq.s32.totalorder %s17, 0
      %p79 = por %p77, %p78
      %p80 = scmp.ne.s32.totalorder %s69, %s72
      %p81 = scmp.eq.s32.totalorder %s22, 1
      %p82 = por %p80, %p81
      %p83 = scmp.ne.s32.totalorder %s72, %s73
      %p84 = scmp.eq.s32.totalorder %s22, 0
      %p85 = por %p83, %p84
      %p86 = scmp.ne.s32.totalorder %s72, %s73
      %p87 = scmp.eq.s32.totalorder %s23, 1
      %p88 = por %p86, %p87
      %p90 = scmp.ne.s32.totalorder %s73, %s89
      %p91 = scmp.eq.s32.totalorder %s23, 0
      %p92 = por %p90, %p91
      %s93 = ssub.s32 %s17, %s24
      %p94 = scmp.eq.s32.totalorder %s93, 0
      %s96 = sadd.s32 %s95, 1
      %s97 = scalar_select %p94, %s95, %s96
      %p100 = pneg %p94
      %p101 = scmp.eq.s32.totalorder %s17, 1
      %p102 = por %p100, %p101
      %p103 = scmp.ne.s32.totalorder %s95, %s98
      %p104 = scmp.eq.s32.totalorder %s17, 0
      %p105 = por %p103, %p104
      %p106 = scmp.ne.s32.totalorder %s95, %s98
      %p107 = scmp.eq.s32.totalorder %s22, 1
      %p108 = por %p106, %p107
      %p109 = scmp.ne.s32.totalorder %s98, %s99
      %p110 = scmp.eq.s32.totalorder %s22, 0
      %p111 = por %p109, %p110
      %p112 = scmp.ne.s32.totalorder %s98, %s99
      %p113 = scmp.eq.s32.totalorder %s23, 1
      %p114 = por %p112, %p113
      %p116 = scmp.ne.s32.totalorder %s99, %s115
      %p117 = scmp.eq.s32.totalorder %s23, 0
      %p118 = por %p116, %p117
      %s119 = ssub.s32 %s17, %s24
      %p120 = scmp.eq.s32.totalorder %s119, 0
      %s122 = sadd.s32 %s121, 1
      %s123 = scalar_select %p120, %s121, %s122
      %p126 = pneg %p120
      %p127 = scmp.eq.s32.totalorder %s17, 1
      %p128 = por %p126, %p127
      %p129 = scmp.ne.s32.totalorder %s121, %s124
      %p130 = scmp.eq.s32.totalorder %s17, 0
      %p131 = por %p129, %p130
      %p132 = scmp.ne.s32.totalorder %s121, %s124
      %p133 = scmp.eq.s32.totalorder %s22, 1
      %p134 = por %p132, %p133
      %p135 = scmp.ne.s32.totalorder %s124, %s125
      %p136 = scmp.eq.s32.totalorder %s22, 0
      %p137 = por %p135, %p136
      %p138 = scmp.ne.s32.totalorder %s124, %s125
      %p139 = scmp.eq.s32.totalorder %s23, 1
      %p140 = por %p138, %p139
      %p142 = scmp.ne.s32.totalorder %s125, %s141
      %p143 = scmp.eq.s32.totalorder %s23, 0
      %p144 = por %p142, %p143
      %s145 = ssub.s32 %s17, %s24
      %p146 = scmp.eq.s32.totalorder %s145, 0
      %s148 = sadd.s32 %s147, 1
      %s149 = scalar_select %p146, %s147, %s148
      %p152 = pneg %p146
      %p153 = scmp.eq.s32.totalorder %s17, 1
      %p154 = por %p152, %p153
      %p155 = scmp.ne.s32.totalorder %s147, %s150
      %p156 = scmp.eq.s32.totalorder %s17, 0
      %p157 = por %p155, %p156
      %p158 = scmp.ne.s32.totalorder %s147, %s150
      %p159 = scmp.eq.s32.totalorder %s22, 1
      %p160 = por %p158, %p159
      %p161 = scmp.ne.s32.totalorder %s150, %s151
      %p162 = scmp.eq.s32.totalorder %s22, 0
      %p163 = por %p161, %p162
      %p164 = scmp.ne.s32.totalorder %s150, %s151
      %p165 = scmp.eq.s32.totalorder %s23, 1
      %p166 = por %p164, %p165
      %p168 = scmp.ne.s32.totalorder %s151, %s167
      %p169 = scmp.eq.s32.totalorder %s23, 0
      %p170 = por %p168, %p169
      %s171 = ssub.s32 %s17, %s24
      %p172 = scmp.eq.s32.totalorder %s171, 0
      %s174 = sadd.s32 %s173, 1
      %s175 = scalar_select %p172, %s173, %s174
      %p178 = pneg %p172
      %p179 = scmp.eq.s32.totalorder %s17, 1
      %p180 = por %p178, %p179
      %p181 = scmp.ne.s32.totalorder %s173, %s176
      %p182 = scmp.eq.s32.totalorder %s17, 0
      %p183 = por %p181, %p182
      %p184 = scmp.ne.s32.totalorder %s173, %s176
      %p185 = scmp.eq.s32.totalorder %s22, 1
      %p186 = por %p184, %p185
      %p187 = scmp.ne.s32.totalorder %s176, %s177
      %p188 = scmp.eq.s32.totalorder %s22, 0
      %p189 = por %p187, %p188
      %p190 = scmp.ne.s32.totalorder %s176, %s177
      %p191 = scmp.eq.s32.totalorder %s23, 1
      %p192 = por %p190, %p191
      %p194 = scmp.ne.s32.totalorder %s177, %s193
      %p195 = scmp.eq.s32.totalorder %s23, 0
      %p196 = por %p194, %p195
      %p197 = scmp.le.s32.totalorder 1, %s17
      %p198 = scmp.lt.s32.totalorder %s17, 3
      %p199 = pnand %p197, %p198
      %p200 = pneg %p199
      // Predicated region
      $region9: #{tpu_custom_call.1} parent=5 // pred_check
        _
      $region10: #{tpu_custom_call.1} parent=5 // pred_check_branch
        %202 = sbr.rel (%p199) target = $region12
      $region11: #{tpu_custom_call.1} parent=5 // pred_region
        %s203 = ssub.s32 %s17, 1
        // Predicated region
        $region13: #{tpu_custom_call.1} parent=11 // pred_check
          %p204 = pneg %p38
        $region14: #{tpu_custom_call.1} parent=11 // pred_check_branch
          %206 = sbr.rel (%p204) target = $region16
        $region15: #{tpu_custom_call.1} parent=11 // pred_region
          %s208 = ssub.s32 4096, 4096
          %209 = vsyncadd [#allocation3], %s208
          %s210 = sshll.u32 [#allocation2], 4
          %s211 = int_to_ptr.vmem [resolvable:$true] %s210
          %216 = dma.hbm_to_vmem [thread:$0]  %s0, 4096, %s211, [#allocation3], 512, 512, 32
        $region16: #{tpu_custom_call.1} parent=11 // pred_fallthru
          _
        // Predicated region
        $region17: #{tpu_custom_call.1} parent=11 // pred_check
          %p217 = pneg %p59
        $region18: #{tpu_custom_call.1} parent=11 // pred_check_branch
          %219 = sbr.rel (%p217) target = $region20
        $region19: #{tpu_custom_call.1} parent=11 // pred_region
          %s221 = ssub.s32 64, 64
          %222 = vsyncadd [#allocation6], %s221
          %s224 = sshll.u32 [#allocation5], 4
          %s225 = int_to_ptr.vmem [resolvable:$true] %s224
          %227 = dma.hbm_to_vmem [thread:$0]  %s1, 64, %s225, [#allocation6]
        $region20: #{tpu_custom_call.1} parent=11 // pred_fallthru
          _
      $region12: #{tpu_custom_call.1} parent=5 // pred_fallthru
        _
      %p228 = scmp.lt.s32.totalorder %s17, 2
      // Predicated region
      $region21: #{tpu_custom_call.1} parent=5 // pred_check
        %p229 = pneg %p228
      $region22: #{tpu_custom_call.1} parent=5 // pred_check_branch
        %231 = sbr.rel (%p229) target = $region24
      $region23: #{tpu_custom_call.1} parent=5 // pred_region
        // Predicated region
        $region25: #{tpu_custom_call.1} parent=23 // pred_check
          %p232 = pneg %p79
        $region26: #{tpu_custom_call.1} parent=23 // pred_check_branch
          %234 = sbr.rel (%p232) target = $region28
        $region27: #{tpu_custom_call.1} parent=23 // pred_region
          %s235 = sand.u32 %s17, 1
          %s236 = scalar_lea.sflag [#allocation3], %s235
          %s237 = sand.u32 %s69, 1
          %s238 = smul.addr %s237, 128
          %s239 = scalar_lea.vmem [#allocation7], %s238
          %s240 = smul.u32 2, %s17
          %s242 = ssub.s32 2048, 2048
          %243 = vsyncadd %s236, %s242
          %s244 = smul.addr %s240, 128
          %s245 = scalar_lea.hbm %s2, %s244
          %s246 = sshll.u32 %s239, 4
          %s247 = int_to_ptr.vmem [resolvable:$true] %s246
          %252 = dma.hbm_to_vmem [thread:$0]  %s245, 2048, %s247, %s236, 512, 256, 16
        $region28: #{tpu_custom_call.1} parent=23 // pred_fallthru
          _
        // Predicated region
        $region29: #{tpu_custom_call.1} parent=23 // pred_check
          %p253 = pneg %p105
        $region30: #{tpu_custom_call.1} parent=23 // pred_check_branch
          %255 = sbr.rel (%p253) target = $region32
        $region31: #{tpu_custom_call.1} parent=23 // pred_region
          %s256 = sand.u32 %s17, 1
          %s257 = scalar_lea.sflag [#allocation3], %s256
          %s258 = sand.u32 %s95, 1
          %s259 = smul.addr %s258, 1024
          %s260 = scalar_lea.vmem [#allocation8], %s259
          %s261 = smul.u32 2, %s17
          %s263 = ssub.s32 16384, 16384
          %264 = vsyncadd %s257, %s263
          %s265 = smul.addr %s261, 128
          %s266 = scalar_lea.hbm %s3, %s265
          %s267 = sshll.u32 %s260, 4
          %s268 = int_to_ptr.vmem [resolvable:$true] %s267
          %273 = dma.hbm_to_vmem [thread:$0]  %s266, 16384, %s268, %s257, 512, 256, 16
        $region32: #{tpu_custom_call.1} parent=23 // pred_fallthru
          _
        // Predicated region
        $region33: #{tpu_custom_call.1} parent=23 // pred_check
          %p274 = pneg %p131
        $region34: #{tpu_custom_call.1} parent=23 // pred_check_branch
          %276 = sbr.rel (%p274) target = $region36
        $region35: #{tpu_custom_call.1} parent=23 // pred_region
          %s277 = smul.u32 2, %s17
          %p278 = scmp.lt.s32.totalorder %s277, 3
          %s279 = scalar_select %p278, %s277, 3
          %s280 = scalar_lea.vmem %s4, %s279
          %s281 = smul.u32 2, %s17
        $region36: #{tpu_custom_call.1} parent=23 // pred_fallthru
          _
        // Predicated region
        $region37: #{tpu_custom_call.1} parent=23 // pred_check
          %p282 = pneg %p157
        $region38: #{tpu_custom_call.1} parent=23 // pred_check_branch
          %284 = sbr.rel (%p282) target = $region40
        $region39: #{tpu_custom_call.1} parent=23 // pred_region
          %s285 = smul.u32 2, %s17
          %p286 = scmp.lt.s32.totalorder %s285, 3
          %s287 = scalar_select %p286, %s285, 3
          %s288 = scalar_lea.vmem %s5, %s287
          %s289 = smul.u32 2, %s17
        $region40: #{tpu_custom_call.1} parent=23 // pred_fallthru
          _
      $region24: #{tpu_custom_call.1} parent=5 // pred_fallthru
        _
      %p290 = scmp.le.s32.totalorder 1, %s17
      %p291 = scmp.lt.s32.totalorder %s17, 3
      %p292 = pnand %p290, %p291
      %p293 = pneg %p292
      // Predicated region
      $region41: #{tpu_custom_call.1} parent=5 // pred_check
        _
      $region42: #{tpu_custom_call.1} parent=5 // pred_check_branch
        %295 = sbr.rel (%p292) target = $region44
      $region43: #{tpu_custom_call.1} parent=5 // pred_region
        %s296 = ssub.s32 %s17, 1
        // Predicated region
        $region45: #{tpu_custom_call.1} parent=43 // pred_check
          %p297 = pneg %p38
        $region46: #{tpu_custom_call.1} parent=43 // pred_check_branch
          %299 = sbr.rel (%p297) target = $region48
        $region47: #{tpu_custom_call.1} parent=43 // pred_region
          %300 = dma.done [#allocation3], 4096
        $region48: #{tpu_custom_call.1} parent=43 // pred_fallthru
          _
        // Predicated region
        $region49: #{tpu_custom_call.1} parent=43 // pred_check
          %p301 = pneg %p59
        $region50: #{tpu_custom_call.1} parent=43 // pred_check_branch
          %303 = sbr.rel (%p301) target = $region52
        $region51: #{tpu_custom_call.1} parent=43 // pred_region
          %304 = dma.done [#allocation6], 64
        $region52: #{tpu_custom_call.1} parent=43 // pred_fallthru
          _
        %s305 = sand.u32 %s22, 1
        %s306 = scalar_lea.sflag [#allocation3], %s305
        %s307 = sand.u32 %s72, 1
        %s308 = smul.addr %s307, 128
        %s309 = scalar_lea.vmem [#allocation7], %s308
        // Predicated region
        $region53: #{tpu_custom_call.1} parent=43 // pred_check
          %p310 = pneg %p85
        $region54: #{tpu_custom_call.1} parent=43 // pred_check_branch
          %312 = sbr.rel (%p310) target = $region56
        $region55: #{tpu_custom_call.1} parent=43 // pred_region
          %313 = dma.done %s306, 2048
        $region56: #{tpu_custom_call.1} parent=43 // pred_fallthru
          _
        %s314 = sand.u32 %s22, 1
        %s315 = scalar_lea.sflag [#allocation3], %s314
        %s316 = sand.u32 %s98, 1
        %s317 = smul.addr %s316, 1024
        %s318 = scalar_lea.vmem [#allocation8], %s317
        // Predicated region
        $region57: #{tpu_custom_call.1} parent=43 // pred_check
          %p319 = pneg %p111
        $region58: #{tpu_custom_call.1} parent=43 // pred_check_branch
          %321 = sbr.rel (%p319) target = $region60
        $region59: #{tpu_custom_call.1} parent=43 // pred_region
          %322 = dma.done %s315, 16384
        $region60: #{tpu_custom_call.1} parent=43 // pred_fallthru
          _
        %p323 = pneg %p38
        %p324 = pneg %p35
        %p325 = pneg %p59
        %p326 = pneg %p56
        %s327 = sand.u32 %s22, 1
        %s328 = scalar_lea.sflag [#allocation3], %s327
        %s329 = sand.u32 %s72, 1
        %s330 = smul.addr %s329, 128
        %s331 = scalar_lea.vmem [#allocation7], %s330
        %p332 = pneg %p85
        %p333 = pneg %p82
        %s334 = sand.u32 %s22, 1
        %s335 = scalar_lea.sflag [#allocation3], %s334
        %s336 = sand.u32 %s98, 1
        %s337 = smul.addr %s336, 1024
        %s338 = scalar_lea.vmem [#allocation8], %s337
        %p339 = pneg %p111
        %p340 = pneg %p108
        %s341 = smul.u32 2, %s22
        %p342 = scmp.lt.s32.totalorder %s341, 3
        %s343 = scalar_select %p342, %s341, 3
        %s344 = scalar_lea.vmem %s4, %s343
        %p345 = pneg %p137
        %p346 = pneg %p134
        %s347 = smul.u32 2, %s22
        %p348 = scmp.lt.s32.totalorder %s347, 3
        %s349 = scalar_select %p348, %s347, 3
        %s350 = scalar_lea.vmem %s5, %s349
        %p351 = pneg %p163
        %p352 = pneg %p160
        %p353 = pneg %p189
        %p354 = pneg %p186
        %s355 = sand.u32 %s176, 1
        %s356 = scalar_lea.sflag [#allocation4], %s355
        %s357 = sand.u32 %s176, 1
        %s358 = smul.addr %s357, 128
        %s359 = scalar_lea.vmem [#allocation9], %s358
        %s360 = smul.u32 2, %s22
        %s361 = smul.u32 2, %s22
        %s362 = smul.u32 2, %s22
        %p363 = scmp.lt.s32.totalorder %s362, 3
        %s364 = scalar_select %p363, %s362, 3
        %s365 = scalar_lea.vmem %s4, %s364
        %s366 = smul.u32 2, %s22
        %s367 = smul.u32 2, %s22
        %p368 = scmp.lt.s32.totalorder %s367, 3
        %s369 = scalar_select %p368, %s367, 3
        %s370 = scalar_lea.vmem %s5, %s369
        %s371 = smul.u32 2, %s22
        %s372 = smul.u32 2, %s22
        %v373 = vld [vmem:[%s318] sm:$0xff]
        %v374 = vld [vmem:[%s318 + $0x8] sm:$0xff]
        %v375 = vld [vmem:[%s318 + $0x10] sm:$0xff]
        %v376 = vld [vmem:[%s318 + $0x18] sm:$0xff]
        %v377 = vld [vmem:[%s318 + $0x20] sm:$0xff]
        %v378 = vld [vmem:[%s318 + $0x28] sm:$0xff]
        %v379 = vld [vmem:[%s318 + $0x30] sm:$0xff]
        %v380 = vld [vmem:[%s318 + $0x38] sm:$0xff]
        %v381 = vld [vmem:[%s318 + $0x40] sm:$0xff]
        %v382 = vld [vmem:[%s318 + $0x48] sm:$0xff]
        %v383 = vld [vmem:[%s318 + $0x50] sm:$0xff]
        %v384 = vld [vmem:[%s318 + $0x58] sm:$0xff]
        %v385 = vld [vmem:[%s318 + $0x60] sm:$0xff]
        %v386 = vld [vmem:[%s318 + $0x68] sm:$0xff]
        %v387 = vld [vmem:[%s318 + $0x70] sm:$0xff]
        %v388 = vld [vmem:[%s318 + $0x78] sm:$0xff]
        %v389 = vld [vmem:[%s318 + $0x80] sm:$0xff]
        %v390 = vld [vmem:[%s318 + $0x88] sm:$0xff]
        %v391 = vld [vmem:[%s318 + $0x90] sm:$0xff]
        %v392 = vld [vmem:[%s318 + $0x98] sm:$0xff]
        %v393 = vld [vmem:[%s318 + $0xa0] sm:$0xff]
        %v394 = vld [vmem:[%s318 + $0xa8] sm:$0xff]
        %v395 = vld [vmem:[%s318 + $0xb0] sm:$0xff]
        %v396 = vld [vmem:[%s318 + $0xb8] sm:$0xff]
        %v397 = vld [vmem:[%s318 + $0xc0] sm:$0xff]
        %v398 = vld [vmem:[%s318 + $0xc8] sm:$0xff]
        %v399 = vld [vmem:[%s318 + $0xd0] sm:$0xff]
        %v400 = vld [vmem:[%s318 + $0xd8] sm:$0xff]
        %v401 = vld [vmem:[%s318 + $0xe0] sm:$0xff]
        %v402 = vld [vmem:[%s318 + $0xe8] sm:$0xff]
        %v403 = vld [vmem:[%s318 + $0xf0] sm:$0xff]
        %v404 = vld [vmem:[%s318 + $0xf8] sm:$0xff]
        %v405 = vld [vmem:[%s318 + $0x100] sm:$0xff]
        %v406 = vld [vmem:[%s318 + $0x108] sm:$0xff]
        %v407 = vld [vmem:[%s318 + $0x110] sm:$0xff]
        %v408 = vld [vmem:[%s318 + $0x118] sm:$0xff]
        %v409 = vld [vmem:[%s318 + $0x120] sm:$0xff]
        %v410 = vld [vmem:[%s318 + $0x128] sm:$0xff]
        %v411 = vld [vmem:[%s318 + $0x130] sm:$0xff]
        %v412 = vld [vmem:[%s318 + $0x138] sm:$0xff]
        %v413 = vld [vmem:[%s318 + $0x140] sm:$0xff]
        %v414 = vld [vmem:[%s318 + $0x148] sm:$0xff]
        %v415 = vld [vmem:[%s318 + $0x150] sm:$0xff]
        %v416 = vld [vmem:[%s318 + $0x158] sm:$0xff]
        %v417 = vld [vmem:[%s318 + $0x160] sm:$0xff]
        %v418 = vld [vmem:[%s318 + $0x168] sm:$0xff]
        %v419 = vld [vmem:[%s318 + $0x170] sm:$0xff]
        %v420 = vld [vmem:[%s318 + $0x178] sm:$0xff]
        %v421 = vld [vmem:[%s318 + $0x180] sm:$0xff]
        %v422 = vld [vmem:[%s318 + $0x188] sm:$0xff]
        %v423 = vld [vmem:[%s318 + $0x190] sm:$0xff]
        %v424 = vld [vmem:[%s318 + $0x198] sm:$0xff]
        %v425 = vld [vmem:[%s318 + $0x1a0] sm:$0xff]
        %v426 = vld [vmem:[%s318 + $0x1a8] sm:$0xff]
        %v427 = vld [vmem:[%s318 + $0x1b0] sm:$0xff]
        %v428 = vld [vmem:[%s318 + $0x1b8] sm:$0xff]
        %v429 = vld [vmem:[%s318 + $0x1c0] sm:$0xff]
        %v430 = vld [vmem:[%s318 + $0x1c8] sm:$0xff]
        %v431 = vld [vmem:[%s318 + $0x1d0] sm:$0xff]
        %v432 = vld [vmem:[%s318 + $0x1d8] sm:$0xff]
        %v433 = vld [vmem:[%s318 + $0x1e0] sm:$0xff]
        %v434 = vld [vmem:[%s318 + $0x1e8] sm:$0xff]
        %v435 = vld [vmem:[%s318 + $0x1f0] sm:$0xff]
        %v436 = vld [vmem:[%s318 + $0x1f8] sm:$0xff]
        %v437 = vld [vmem:[%s318 + $0x200] sm:$0xff]
        %v438 = vld [vmem:[%s318 + $0x208] sm:$0xff]
        %v439 = vld [vmem:[%s318 + $0x210] sm:$0xff]
        %v440 = vld [vmem:[%s318 + $0x218] sm:$0xff]
        %v441 = vld [vmem:[%s318 + $0x220] sm:$0xff]
        %v442 = vld [vmem:[%s318 + $0x228] sm:$0xff]
        %v443 = vld [vmem:[%s318 + $0x230] sm:$0xff]
        %v444 = vld [vmem:[%s318 + $0x238] sm:$0xff]
        %v445 = vld [vmem:[%s318 + $0x240] sm:$0xff]
        %v446 = vld [vmem:[%s318 + $0x248] sm:$0xff]
        %v447 = vld [vmem:[%s318 + $0x250] sm:$0xff]
        %v448 = vld [vmem:[%s318 + $0x258] sm:$0xff]
        %v449 = vld [vmem:[%s318 + $0x260] sm:$0xff]
        %v450 = vld [vmem:[%s318 + $0x268] sm:$0xff]
        %v451 = vld [vmem:[%s318 + $0x270] sm:$0xff]
        %v452 = vld [vmem:[%s318 + $0x278] sm:$0xff]
        %v453 = vld [vmem:[%s318 + $0x280] sm:$0xff]
        %v454 = vld [vmem:[%s318 + $0x288] sm:$0xff]
        %v455 = vld [vmem:[%s318 + $0x290] sm:$0xff]
        %v456 = vld [vmem:[%s318 + $0x298] sm:$0xff]
        %v457 = vld [vmem:[%s318 + $0x2a0] sm:$0xff]
        %v458 = vld [vmem:[%s318 + $0x2a8] sm:$0xff]
        %v459 = vld [vmem:[%s318 + $0x2b0] sm:$0xff]
        %v460 = vld [vmem:[%s318 + $0x2b8] sm:$0xff]
        %v461 = vld [vmem:[%s318 + $0x2c0] sm:$0xff]
        %v462 = vld [vmem:[%s318 + $0x2c8] sm:$0xff]
        %v463 = vld [vmem:[%s318 + $0x2d0] sm:$0xff]
        %v464 = vld [vmem:[%s318 + $0x2d8] sm:$0xff]
        %v465 = vld [vmem:[%s318 + $0x2e0] sm:$0xff]
        %v466 = vld [vmem:[%s318 + $0x2e8] sm:$0xff]
        %v467 = vld [vmem:[%s318 + $0x2f0] sm:$0xff]
        %v468 = vld [vmem:[%s318 + $0x2f8] sm:$0xff]
        %v469 = vld [vmem:[%s318 + $0x300] sm:$0xff]
        %v470 = vld [vmem:[%s318 + $0x308] sm:$0xff]
        %v471 = vld [vmem:[%s318 + $0x310] sm:$0xff]
        %v472 = vld [vmem:[%s318 + $0x318] sm:$0xff]
        %v473 = vld [vmem:[%s318 + $0x320] sm:$0xff]
        %v474 = vld [vmem:[%s318 + $0x328] sm:$0xff]
        %v475 = vld [vmem:[%s318 + $0x330] sm:$0xff]
        %v476 = vld [vmem:[%s318 + $0x338] sm:$0xff]
        %v477 = vld [vmem:[%s318 + $0x340] sm:$0xff]
        %v478 = vld [vmem:[%s318 + $0x348] sm:$0xff]
        %v479 = vld [vmem:[%s318 + $0x350] sm:$0xff]
        %v480 = vld [vmem:[%s318 + $0x358] sm:$0xff]
        %v481 = vld [vmem:[%s318 + $0x360] sm:$0xff]
        %v482 = vld [vmem:[%s318 + $0x368] sm:$0xff]
        %v483 = vld [vmem:[%s318 + $0x370] sm:$0xff]
        %v484 = vld [vmem:[%s318 + $0x378] sm:$0xff]
        %v485 = vld [vmem:[%s318 + $0x380] sm:$0xff]
        %v486 = vld [vmem:[%s318 + $0x388] sm:$0xff]
        %v487 = vld [vmem:[%s318 + $0x390] sm:$0xff]
        %v488 = vld [vmem:[%s318 + $0x398] sm:$0xff]
        %v489 = vld [vmem:[%s318 + $0x3a0] sm:$0xff]
        %v490 = vld [vmem:[%s318 + $0x3a8] sm:$0xff]
        %v491 = vld [vmem:[%s318 + $0x3b0] sm:$0xff]
        %v492 = vld [vmem:[%s318 + $0x3b8] sm:$0xff]
        %v493 = vld [vmem:[%s318 + $0x3c0] sm:$0xff]
        %v494 = vld [vmem:[%s318 + $0x3c8] sm:$0xff]
        %v495 = vld [vmem:[%s318 + $0x3d0] sm:$0xff]
        %v496 = vld [vmem:[%s318 + $0x3d8] sm:$0xff]
        %v497 = vld [vmem:[%s318 + $0x3e0] sm:$0xff]
        %v498 = vld [vmem:[%s318 + $0x3e8] sm:$0xff]
        %v499 = vld [vmem:[%s318 + $0x3f0] sm:$0xff]
        %v500 = vld [vmem:[%s318 + $0x3f8] sm:$0xff]
        %v501 = vld [vmem:[#allocation2] sm:$0xff]
        %v502 = vld [vmem:[#allocation2 + $0x8] sm:$0xff]
        %v503 = vld [vmem:[#allocation2 + $0x10] sm:$0xff]
        %v504 = vld [vmem:[#allocation2 + $0x18] sm:$0xff]
        %v505 = vld [vmem:[#allocation2 + $0x20] sm:$0xff]
        %v506 = vld [vmem:[#allocation2 + $0x28] sm:$0xff]
        %v507 = vld [vmem:[#allocation2 + $0x30] sm:$0xff]
        %v508 = vld [vmem:[#allocation2 + $0x38] sm:$0xff]
        %v509 = vld [vmem:[#allocation2 + $0x40] sm:$0xff]
        %v510 = vld [vmem:[#allocation2 + $0x48] sm:$0xff]
        %v511 = vld [vmem:[#allocation2 + $0x50] sm:$0xff]
        %v512 = vld [vmem:[#allocation2 + $0x58] sm:$0xff]
        %v513 = vld [vmem:[#allocation2 + $0x60] sm:$0xff]
        %v514 = vld [vmem:[#allocation2 + $0x68] sm:$0xff]
        %v515 = vld [vmem:[#allocation2 + $0x70] sm:$0xff]
        %v516 = vld [vmem:[#allocation2 + $0x78] sm:$0xff]
        %v517 = vld [vmem:[#allocation2 + $0x80] sm:$0xff]
        %v518 = vld [vmem:[#allocation2 + $0x88] sm:$0xff]
        %v519 = vld [vmem:[#allocation2 + $0x90] sm:$0xff]
        %v520 = vld [vmem:[#allocation2 + $0x98] sm:$0xff]
        %v521 = vld [vmem:[#allocation2 + $0xa0] sm:$0xff]
        %v522 = vld [vmem:[#allocation2 + $0xa8] sm:$0xff]
        %v523 = vld [vmem:[#allocation2 + $0xb0] sm:$0xff]
        %v524 = vld [vmem:[#allocation2 + $0xb8] sm:$0xff]
        %v525 = vld [vmem:[#allocation2 + $0xc0] sm:$0xff]
        %v526 = vld [vmem:[#allocation2 + $0xc8] sm:$0xff]
        %v527 = vld [vmem:[#allocation2 + $0xd0] sm:$0xff]
        %v528 = vld [vmem:[#allocation2 + $0xd8] sm:$0xff]
        %v529 = vld [vmem:[#allocation2 + $0xe0] sm:$0xff]
        %v530 = vld [vmem:[#allocation2 + $0xe8] sm:$0xff]
        %v531 = vld [vmem:[#allocation2 + $0xf0] sm:$0xff]
        %v532 = vld [vmem:[#allocation2 + $0xf8] sm:$0xff]
        %533 = vmatprep.subr.mxu0 %v374
        %534 = vmatpush1.msra.mxu0 %v373
        %535 = vmatprep.subr.mxu0 %v376
        %536 = vmatpush1.msra.mxu0 %v375
        %537 = vmatprep.subr.mxu0 %v378
        %538 = vmatpush1.msra.mxu0 %v377
        %539 = vmatprep.subr.mxu0 %v380
        %540 = vmatpush1.msra.mxu0 %v379
        %541 = vmatprep.subr.mxu0 %v382
        %542 = vmatpush1.msra.mxu0 %v381
        %543 = vmatprep.subr.mxu0 %v384
        %544 = vmatpush1.msra.mxu0 %v383
        %545 = vmatprep.subr.mxu0 %v386
        %546 = vmatpush1.msra.mxu0 %v385
        %547 = vmatprep.subr.mxu0 %v388
        %548 = vmatpush1.msra.mxu0 %v387
        %549 = vmatprep.subr.mxu0 %v390
        %550 = vmatpush1.msra.mxu0 %v389
        %551 = vmatprep.subr.mxu0 %v392
        %552 = vmatpush1.msra.mxu0 %v391
        %553 = vmatprep.subr.mxu0 %v394
        %554 = vmatpush1.msra.mxu0 %v393
        %555 = vmatprep.subr.mxu0 %v396
        %556 = vmatpush1.msra.mxu0 %v395
        %557 = vmatprep.subr.mxu0 %v398
        %558 = vmatpush1.msra.mxu0 %v397
        %559 = vmatprep.subr.mxu0 %v400
        %560 = vmatpush1.msra.mxu0 %v399
        %561 = vmatprep.subr.mxu0 %v402
        %562 = vmatpush1.msra.mxu0 %v401
        %563 = vmatprep.subr.mxu0 %v404
        %564 = vmatpush1.msra.mxu0 %v403
        %565 = vmatprep.subr.mxu0 %v406
        %566 = vmatpush1.msra.mxu0 %v405
        %567 = vmatprep.subr.mxu0 %v408
        %568 = vmatpush1.msra.mxu0 %v407
        %569 = vmatprep.subr.mxu0 %v410
        %570 = vmatpush1.msra.mxu0 %v409
        %571 = vmatprep.subr.mxu0 %v412
        %572 = vmatpush1.msra.mxu0 %v411
        %573 = vmatprep.subr.mxu0 %v414
        %574 = vmatpush1.msra.mxu0 %v413
        %575 = vmatprep.subr.mxu0 %v416
        %576 = vmatpush1.msra.mxu0 %v415
        %577 = vmatprep.subr.mxu0 %v418
        %578 = vmatpush1.msra.mxu0 %v417
        %579 = vmatprep.subr.mxu0 %v420
        %580 = vmatpush1.msra.mxu0 %v419
        %581 = vmatprep.subr.mxu0 %v422
        %582 = vmatpush1.msra.mxu0 %v421
        %583 = vmatprep.subr.mxu0 %v424
        %584 = vmatpush1.msra.mxu0 %v423
        %585 = vmatprep.subr.mxu0 %v426
        %586 = vmatpush1.msra.mxu0 %v425
        %587 = vmatprep.subr.mxu0 %v428
        %588 = vmatpush1.msra.mxu0 %v427
        %589 = vmatprep.subr.mxu0 %v430
        %590 = vmatpush1.msra.mxu0 %v429
        %591 = vmatprep.subr.mxu0 %v432
        %592 = vmatpush1.msra.mxu0 %v431
        %593 = vmatprep.subr.mxu0 %v434
        %594 = vmatpush1.msra.mxu0 %v433
        %595 = vmatprep.subr.mxu0 %v436
        %596 = vmatpush1.msra.mxu0 %v435
        %597 = vmatprep.mubr.f32.mxu0 %v502
        %598 = vmatmul.mubr.f32.gmra.mrb[0].mxu0 %v501
        %v599 = vpop.f32.mrb[0].mxu0
        %v600 = vadd.f32 0.0, %v599
        %v601 = vpop.f32.mrb[0].mxu0
        %v602 = vadd.f32 0.0, %v601
        %603 = vmatprep.mubr.f32.mxu0 %v506
        %604 = vmatmul.mubr.f32.gmra.mrb[0].mxu0 %v505
        %v605 = vpop.f32.mrb[0].mxu0
        %v606 = vadd.f32 0.0, %v605
        %v607 = vpop.f32.mrb[0].mxu0
        %v608 = vadd.f32 0.0, %v607
        %609 = vmatprep.mubr.f32.mxu0 %v510
        %610 = vmatmul.mubr.f32.gmra.mrb[0].mxu0 %v509
        %v611 = vpop.f32.mrb[0].mxu0
        %v612 = vadd.f32 0.0, %v611
        %v613 = vpop.f32.mrb[0].mxu0
        %v614 = vadd.f32 0.0, %v613
        %615 = vmatprep.mubr.f32.mxu0 %v514
        %616 = vmatmul.mubr.f32.gmra.mrb[0].mxu0 %v513
        %v617 = vpop.f32.mrb[0].mxu0
        %v618 = vadd.f32 0.0, %v617
        %v619 = vpop.f32.mrb[0].mxu0
        %v620 = vadd.f32 0.0, %v619
        %621 = vmatprep.mubr.f32.mxu0 %v518
        %622 = vmatmul.mubr.f32.gmra.mrb[0].mxu0 %v517
        %v623 = vpop.f32.mrb[0].mxu0
        %v624 = vadd.f32 0.0, %v623
        %v625 = vpop.f32.mrb[0].mxu0
        %v626 = vadd.f32 0.0, %v625
        %627 = vmatprep.mubr.f32.mxu0 %v522
        %628 = vmatmul.mubr.f32.gmra.mrb[0].mxu0 %v521
        %v629 = vpop.f32.mrb[0].mxu0
        %v630 = vadd.f32 0.0, %v629
        %v631 = vpop.f32.mrb[0].mxu0
        %v632 = vadd.f32 0.0, %v631
        %633 = vmatprep.mubr.f32.mxu0 %v526
        %634 = vmatmul.mubr.f32.gmra.mrb[0].mxu0 %v525
        %v635 = vpop.f32.mrb[0].mxu0
        %v636 = vadd.f32 0.0, %v635
        %v637 = vpop.f32.mrb[0].mxu0
        %v638 = vadd.f32 0.0, %v637
        %639 = vmatprep.mubr.f32.mxu0 %v530
        %640 = vmatmul.mubr.f32.gmra.mrb[0].mxu0 %v529
        %v641 = vpop.f32.mrb[0].mxu0
        %v642 = vadd.f32 0.0, %v641
        %v643 = vpop.f32.mrb[0].mxu0
        %v644 = vadd.f32 0.0, %v643
        %645 = vdwg.mxu0
        %646 = vmatprep.subr.mxu0 %v438
        %647 = vmatpush1.msra.mxu0 %v437
        %648 = vmatprep.subr.mxu0 %v440
        %649 = vmatpush1.msra.mxu0 %v439
        %650 = vmatprep.subr.mxu0 %v442
        %651 = vmatpush1.msra.mxu0 %v441
        %652 = vmatprep.subr.mxu0 %v444
        %653 = vmatpush1.msra.mxu0 %v443
        %654 = vmatprep.subr.mxu0 %v446
        %655 = vmatpush1.msra.mxu0 %v445
        %656 = vmatprep.subr.mxu0 %v448
        %657 = vmatpush1.msra.mxu0 %v447
        %658 = vmatprep.subr.mxu0 %v450
        %659 = vmatpush1.msra.mxu0 %v449
        %660 = vmatprep.subr.mxu0 %v452
        %661 = vmatpush1.msra.mxu0 %v451
        %662 = vmatprep.subr.mxu0 %v454
        %663 = vmatpush1.msra.mxu0 %v453
        %664 = vmatprep.subr.mxu0 %v456
        %665 = vmatpush1.msra.mxu0 %v455
        %666 = vmatprep.subr.mxu0 %v458
        %667 = vmatpush1.msra.mxu0 %v457
        %668 = vmatprep.subr.mxu0 %v460
        %669 = vmatpush1.msra.mxu0 %v459
        %670 = vmatprep.subr.mxu0 %v462
        %671 = vmatpush1.msra.mxu0 %v461
        %672 = vmatprep.subr.mxu0 %v464
        %673 = vmatpush1.msra.mxu0 %v463
        %674 = vmatprep.subr.mxu0 %v466
        %675 = vmatpush1.msra.mxu0 %v465
        %676 = vmatprep.subr.mxu0 %v468
        %677 = vmatpush1.msra.mxu0 %v467
        %678 = vmatprep.subr.mxu0 %v470
        %679 = vmatpush1.msra.mxu0 %v469
        %680 = vmatprep.subr.mxu0 %v472
        %681 = vmatpush1.msra.mxu0 %v471
        %682 = vmatprep.subr.mxu0 %v474
        %683 = vmatpush1.msra.mxu0 %v473
        %684 = vmatprep.subr.mxu0 %v476
        %685 = vmatpush1.msra.mxu0 %v475
        %686 = vmatprep.subr.mxu0 %v478
        %687 = vmatpush1.msra.mxu0 %v477
        %688 = vmatprep.subr.mxu0 %v480
        %689 = vmatpush1.msra.mxu0 %v479
        %690 = vmatprep.subr.mxu0 %v482
        %691 = vmatpush1.msra.mxu0 %v481
        %692 = vmatprep.subr.mxu0 %v484
        %693 = vmatpush1.msra.mxu0 %v483
        %694 = vmatprep.subr.mxu0 %v486
        %695 = vmatpush1.msra.mxu0 %v485
        %696 = vmatprep.subr.mxu0 %v488
        %697 = vmatpush1.msra.mxu0 %v487
        %698 = vmatprep.subr.mxu0 %v490
        %699 = vmatpush1.msra.mxu0 %v489
        %700 = vmatprep.subr.mxu0 %v492
        %701 = vmatpush1.msra.mxu0 %v491
        %702 = vmatprep.subr.mxu0 %v494
        %703 = vmatpush1.msra.mxu0 %v493
        %704 = vmatprep.subr.mxu0 %v496
        %705 = vmatpush1.msra.mxu0 %v495
        %706 = vmatprep.subr.mxu0 %v498
        %707 = vmatpush1.msra.mxu0 %v497
        %708 = vmatprep.subr.mxu0 %v500
        %709 = vmatpush1.msra.mxu0 %v499
        %710 = vmatprep.mubr.f32.mxu0 %v504
        %711 = vmatmul.mubr.f32.gmra.mrb[0].mxu0 %v503
        %v712 = vpop.f32.mrb[0].mxu0
        %v713 = vadd.f32 %v600, %v712
        %v714 = vpop.f32.mrb[0].mxu0
        %v715 = vadd.f32 %v602, %v714
        %716 = vmatprep.mubr.f32.mxu0 %v508
        %717 = vmatmul.mubr.f32.gmra.mrb[0].mxu0 %v507
        %v718 = vpop.f32.mrb[0].mxu0
        %v719 = vadd.f32 %v606, %v718
        %v720 = vpop.f32.mrb[0].mxu0
        %v721 = vadd.f32 %v608, %v720
        %722 = vmatprep.mubr.f32.mxu0 %v512
        %723 = vmatmul.mubr.f32.gmra.mrb[0].mxu0 %v511
        %v724 = vpop.f32.mrb[0].mxu0
        %v725 = vadd.f32 %v612, %v724
        %v726 = vpop.f32.mrb[0].mxu0
        %v727 = vadd.f32 %v614, %v726
        %728 = vmatprep.mubr.f32.mxu0 %v516
        %729 = vmatmul.mubr.f32.gmra.mrb[0].mxu0 %v515
        %v730 = vpop.f32.mrb[0].mxu0
        %v731 = vadd.f32 %v618, %v730
        %v732 = vpop.f32.mrb[0].mxu0
        %v733 = vadd.f32 %v620, %v732
        %734 = vmatprep.mubr.f32.mxu0 %v520
        %735 = vmatmul.mubr.f32.gmra.mrb[0].mxu0 %v519
        %v736 = vpop.f32.mrb[0].mxu0
        %v737 = vadd.f32 %v624, %v736
        %v738 = vpop.f32.mrb[0].mxu0
        %v739 = vadd.f32 %v626, %v738
        %740 = vmatprep.mubr.f32.mxu0 %v524
        %741 = vmatmul.mubr.f32.gmra.mrb[0].mxu0 %v523
        %v742 = vpop.f32.mrb[0].mxu0
        %v743 = vadd.f32 %v630, %v742
        %v744 = vpop.f32.mrb[0].mxu0
        %v745 = vadd.f32 %v632, %v744
        %746 = vmatprep.mubr.f32.mxu0 %v528
        %747 = vmatmul.mubr.f32.gmra.mrb[0].mxu0 %v527
        %v748 = vpop.f32.mrb[0].mxu0
        %v749 = vadd.f32 %v636, %v748
        %v750 = vpop.f32.mrb[0].mxu0
        %v751 = vadd.f32 %v638, %v750
        %752 = vmatprep.mubr.f32.mxu0 %v532
        %753 = vmatmul.mubr.f32.gmra.mrb[0].mxu0 %v531
        %v754 = vpop.f32.mrb[0].mxu0
        %v755 = vadd.f32 %v642, %v754
        %v756 = vpop.f32.mrb[0].mxu0
        %v757 = vadd.f32 %v644, %v756
        %758 = vdwg.mxu0
        %v759 = vld [vmem:[#allocation5] sm:$0xf]
        %v761 = vlaneseq
        %v762 = vshrl.u32 %v761, 7
        %v763 = vsub.s32 0, %v762
        %v764 = vrot.slane %v759, %v763
        %v765 = vlaneseq
        %v766 = vshrl.u32 %v765, 7
        %v767 = vsub.s32 1, %v766
        %v768 = vrot.slane %v759, %v767
        %v769 = vlaneseq
        %v770 = vshrl.u32 %v769, 7
        %v771 = vsub.s32 2, %v770
        %v772 = vrot.slane %v759, %v771
        %v773 = vlaneseq
        %v774 = vshrl.u32 %v773, 7
        %v775 = vsub.s32 3, %v774
        %v776 = vrot.slane %v759, %v775
        %781 = vmatprep.subr.mxu0 %v374
        %782 = vmatpush1.msra.mxu0 %v373
        %783 = vmatprep.subr.mxu0 %v376
        %784 = vmatpush1.msra.mxu0 %v375
        %785 = vmatprep.subr.mxu0 %v378
        %786 = vmatpush1.msra.mxu0 %v377
        %787 = vmatprep.subr.mxu0 %v380
        %788 = vmatpush1.msra.mxu0 %v379
        %789 = vmatprep.subr.mxu0 %v382
        %790 = vmatpush1.msra.mxu0 %v381
        %791 = vmatprep.subr.mxu0 %v384
        %792 = vmatpush1.msra.mxu0 %v383
        %793 = vmatprep.subr.mxu0 %v386
        %794 = vmatpush1.msra.mxu0 %v385
        %795 = vmatprep.subr.mxu0 %v388
        %796 = vmatpush1.msra.mxu0 %v387
        %797 = vmatprep.subr.mxu0 %v390
        %798 = vmatpush1.msra.mxu0 %v389
        %799 = vmatprep.subr.mxu0 %v392
        %800 = vmatpush1.msra.mxu0 %v391
        %801 = vmatprep.subr.mxu0 %v394
        %802 = vmatpush1.msra.mxu0 %v393
        %803 = vmatprep.subr.mxu0 %v396
        %804 = vmatpush1.msra.mxu0 %v395
        %805 = vmatprep.subr.mxu0 %v398
        %806 = vmatpush1.msra.mxu0 %v397
        %807 = vmatprep.subr.mxu0 %v400
        %808 = vmatpush1.msra.mxu0 %v399
        %809 = vmatprep.subr.mxu0 %v402
        %810 = vmatpush1.msra.mxu0 %v401
        %811 = vmatprep.subr.mxu0 %v404
        %812 = vmatpush1.msra.mxu0 %v403
        %813 = vmatprep.subr.mxu0 %v406
        %814 = vmatpush1.msra.mxu0 %v405
        %815 = vmatprep.subr.mxu0 %v408
        %816 = vmatpush1.msra.mxu0 %v407
        %817 = vmatprep.subr.mxu0 %v410
        %818 = vmatpush1.msra.mxu0 %v409
        %819 = vmatprep.subr.mxu0 %v412
        %820 = vmatpush1.msra.mxu0 %v411
        %821 = vmatprep.subr.mxu0 %v414
        %822 = vmatpush1.msra.mxu0 %v413
        %823 = vmatprep.subr.mxu0 %v416
        %824 = vmatpush1.msra.mxu0 %v415
        %825 = vmatprep.subr.mxu0 %v418
        %826 = vmatpush1.msra.mxu0 %v417
        %827 = vmatprep.subr.mxu0 %v420
        %828 = vmatpush1.msra.mxu0 %v419
        %829 = vmatprep.subr.mxu0 %v422
        %830 = vmatpush1.msra.mxu0 %v421
        %831 = vmatprep.subr.mxu0 %v424
        %832 = vmatpush1.msra.mxu0 %v423
        %833 = vmatprep.subr.mxu0 %v426
        %834 = vmatpush1.msra.mxu0 %v425
        %835 = vmatprep.subr.mxu0 %v428
        %836 = vmatpush1.msra.mxu0 %v427
        %837 = vmatprep.subr.mxu0 %v430
        %838 = vmatpush1.msra.mxu0 %v429
        %839 = vmatprep.subr.mxu0 %v432
        %840 = vmatpush1.msra.mxu0 %v431
        %841 = vmatprep.subr.mxu0 %v434
        %842 = vmatpush1.msra.mxu0 %v433
        %843 = vmatprep.subr.mxu0 %v436
        %844 = vmatpush1.msra.mxu0 %v435
        %845 = vmatprep.mubr.f32.mxu0 %v768
        %846 = vmatmul.mubr.f32.gmra.mrb[0].mxu0 %v764
        %v847 = vpop.f32.mrb[0].mxu0
        %v848 = vadd.f32 0.0, %v847
        %v849 = vpop.f32.mrb[0].mxu0
        %v850 = vadd.f32 0.0, %v849
        %851 = vdwg.mxu0
        %852 = vmatprep.subr.mxu0 %v438
        %853 = vmatpush1.msra.mxu0 %v437
        %854 = vmatprep.subr.mxu0 %v440
        %855 = vmatpush1.msra.mxu0 %v439
        %856 = vmatprep.subr.mxu0 %v442
        %857 = vmatpush1.msra.mxu0 %v441
        %858 = vmatprep.subr.mxu0 %v444
        %859 = vmatpush1.msra.mxu0 %v443
        %860 = vmatprep.subr.mxu0 %v446
        %861 = vmatpush1.msra.mxu0 %v445
        %862 = vmatprep.subr.mxu0 %v448
        %863 = vmatpush1.msra.mxu0 %v447
        %864 = vmatprep.subr.mxu0 %v450
        %865 = vmatpush1.msra.mxu0 %v449
        %866 = vmatprep.subr.mxu0 %v452
        %867 = vmatpush1.msra.mxu0 %v451
        %868 = vmatprep.subr.mxu0 %v454
        %869 = vmatpush1.msra.mxu0 %v453
        %870 = vmatprep.subr.mxu0 %v456
        %871 = vmatpush1.msra.mxu0 %v455
        %872 = vmatprep.subr.mxu0 %v458
        %873 = vmatpush1.msra.mxu0 %v457
        %874 = vmatprep.subr.mxu0 %v460
        %875 = vmatpush1.msra.mxu0 %v459
        %876 = vmatprep.subr.mxu0 %v462
        %877 = vmatpush1.msra.mxu0 %v461
        %878 = vmatprep.subr.mxu0 %v464
        %879 = vmatpush1.msra.mxu0 %v463
        %880 = vmatprep.subr.mxu0 %v466
        %881 = vmatpush1.msra.mxu0 %v465
        %882 = vmatprep.subr.mxu0 %v468
        %883 = vmatpush1.msra.mxu0 %v467
        %884 = vmatprep.subr.mxu0 %v470
        %885 = vmatpush1.msra.mxu0 %v469
        %886 = vmatprep.subr.mxu0 %v472
        %887 = vmatpush1.msra.mxu0 %v471
        %888 = vmatprep.subr.mxu0 %v474
        %889 = vmatpush1.msra.mxu0 %v473
        %890 = vmatprep.subr.mxu0 %v476
        %891 = vmatpush1.msra.mxu0 %v475
        %892 = vmatprep.subr.mxu0 %v478
        %893 = vmatpush1.msra.mxu0 %v477
        %894 = vmatprep.subr.mxu0 %v480
        %895 = vmatpush1.msra.mxu0 %v479
        %896 = vmatprep.subr.mxu0 %v482
        %897 = vmatpush1.msra.mxu0 %v481
        %898 = vmatprep.subr.mxu0 %v484
        %899 = vmatpush1.msra.mxu0 %v483
        %900 = vmatprep.subr.mxu0 %v486
        %901 = vmatpush1.msra.mxu0 %v485
        %902 = vmatprep.subr.mxu0 %v488
        %903 = vmatpush1.msra.mxu0 %v487
        %904 = vmatprep.subr.mxu0 %v490
        %905 = vmatpush1.msra.mxu0 %v489
        %906 = vmatprep.subr.mxu0 %v492
        %907 = vmatpush1.msra.mxu0 %v491
        %908 = vmatprep.subr.mxu0 %v494
        %909 = vmatpush1.msra.mxu0 %v493
        %910 = vmatprep.subr.mxu0 %v496
        %911 = vmatpush1.msra.mxu0 %v495
        %912 = vmatprep.subr.mxu0 %v498
        %913 = vmatpush1.msra.mxu0 %v497
        %914 = vmatprep.subr.mxu0 %v500
        %915 = vmatpush1.msra.mxu0 %v499
        %916 = vmatprep.mubr.f32.mxu0 %v776
        %917 = vmatmul.mubr.f32.gmra.mrb[0].mxu0 %v772
        %v918 = vpop.f32.mrb[0].mxu0
        %v919 = vadd.f32 %v848, %v918
        %v920 = vpop.f32.mrb[0].mxu0
        %v921 = vadd.f32 %v850, %v920
        %922 = vdwg.mxu0
        %v923 = vmul.f32 %v919, 0.015625
        %v924 = vmul.f32 %v921, 0.015625
        %v925 = vlaneseq
        %v926 = vshrl.u32 %v925, 7
        %v927 = vsub.s32 0, %v926
        %v928 = vrot.slane %v923, %v927
        %v929 = vlaneseq
        %v930 = vshrl.u32 %v929, 7
        %v931 = vsub.s32 0, %v930
        %v932 = vrot.slane %v924, %v931
        %v933 = vsub.f32 %v713, %v928
        %v934 = vsub.f32 %v715, %v932
        %v935 = vsub.f32 %v719, %v928
        %v936 = vsub.f32 %v721, %v932
        %v937 = vsub.f32 %v725, %v928
        %v938 = vsub.f32 %v727, %v932
        %v939 = vsub.f32 %v731, %v928
        %v940 = vsub.f32 %v733, %v932
        %v941 = vsub.f32 %v737, %v928
        %v942 = vsub.f32 %v739, %v932
        %v943 = vsub.f32 %v743, %v928
        %v944 = vsub.f32 %v745, %v932
        %v945 = vsub.f32 %v749, %v928
        %v946 = vsub.f32 %v751, %v932
        %v947 = vsub.f32 %v755, %v928
        %v948 = vsub.f32 %v757, %v932
        %v949 = vmul.f32 %v933, %v933
        %v950 = vmul.f32 %v934, %v934
        %v951 = vmul.f32 %v935, %v935
        %v952 = vmul.f32 %v936, %v936
        %v953 = vmul.f32 %v937, %v937
        %v954 = vmul.f32 %v938, %v938
        %v955 = vmul.f32 %v939, %v939
        %v956 = vmul.f32 %v940, %v940
        %v957 = vmul.f32 %v941, %v941
        %v958 = vmul.f32 %v942, %v942
        %v959 = vmul.f32 %v943, %v943
        %v960 = vmul.f32 %v944, %v944
        %v961 = vmul.f32 %v945, %v945
        %v962 = vmul.f32 %v946, %v946
        %v963 = vmul.f32 %v947, %v947
        %v964 = vmul.f32 %v948, %v948
        %vm965 = vcmask 523264
        %v967 = vsel %vm965, 1.0, 0
        %969 = vmatprep.subr.mxu0 %v950
        %970 = vmatpush1.msra.mxu0 %v949
        %971 = vmatprep.subr.mxu0 %v952
        %972 = vmatpush1.msra.mxu0 %v951
        %973 = vmatprep.subr.mxu0 %v954
        %974 = vmatpush1.msra.mxu0 %v953
        %975 = vmatprep.subr.mxu0 %v956
        %976 = vmatpush1.msra.mxu0 %v955
        %977 = vmatprep.subr.mxu0 %v958
        %978 = vmatpush1.msra.mxu0 %v957
        %979 = vmatprep.subr.mxu0 %v960
        %980 = vmatpush1.msra.mxu0 %v959
        %981 = vmatprep.subr.mxu0 %v962
        %982 = vmatpush1.msra.mxu0 %v961
        %983 = vmatprep.subr.mxu0 %v964
        %984 = vmatpush1.msra.mxu0 %v963
        %985 = vmatprep.subr.mxu0 0.0
        %986 = vmatpush1.msra.mxu0 0.0
        %987 = vmatprep.subr.mxu0 0.0
        %988 = vmatpush1.msra.mxu0 0.0
        %989 = vmatprep.subr.mxu0 0.0
        %990 = vmatpush1.msra.mxu0 0.0
        %991 = vmatprep.subr.mxu0 0.0
        %992 = vmatpush1.msra.mxu0 0.0
        %993 = vmatprep.subr.mxu0 0.0
        %994 = vmatpush1.msra.mxu0 0.0
        %995 = vmatprep.subr.mxu0 0.0
        %996 = vmatpush1.msra.mxu0 0.0
        %997 = vmatprep.subr.mxu0 0.0
        %998 = vmatpush1.msra.mxu0 0.0
        %999 = vmatprep.subr.mxu0 0.0
        %1000 = vmatpush1.msra.mxu0 0.0
        %1001 = vmatprep.subr.mxu0 0.0
        %1002 = vmatpush1.msra.mxu0 0.0
        %1003 = vmatprep.subr.mxu0 0.0
        %1004 = vmatpush1.msra.mxu0 0.0
        %1005 = vmatprep.subr.mxu0 0.0
        %1006 = vmatpush1.msra.mxu0 0.0
        %1007 = vmatprep.subr.mxu0 0.0
        %1008 = vmatpush1.msra.mxu0 0.0
        %1009 = vmatprep.subr.mxu0 0.0
        %1010 = vmatpush1.msra.mxu0 0.0
        %1011 = vmatprep.subr.mxu0 0.0
        %1012 = vmatpush1.msra.mxu0 0.0
        %1013 = vmatprep.subr.mxu0 0.0
        %1014 = vmatpush1.msra.mxu0 0.0
        %1015 = vmatprep.subr.mxu0 0.0
        %1016 = vmatpush1.msra.mxu0 0.0
        %1017 = vmatprep.subr.mxu0 0.0
        %1018 = vmatpush1.msra.mxu0 0.0
        %1019 = vmatprep.subr.mxu0 0.0
        %1020 = vmatpush1.msra.mxu0 0.0
        %1021 = vmatprep.subr.mxu0 0.0
        %1022 = vmatpush1.msra.mxu0 0.0
        %1023 = vmatprep.subr.mxu0 0.0
        %1024 = vmatpush1.msra.mxu0 0.0
        %1025 = vmatprep.subr.mxu0 0.0
        %1026 = vmatpush1.msra.mxu0 0.0
        %1027 = vmatprep.subr.mxu0 0.0
        %1028 = vmatpush1.msra.mxu0 0.0
        %1029 = vmatprep.subr.mxu0 0.0
        %1030 = vmatpush1.msra.mxu0 0.0
        %1031 = vmatprep.subr.mxu0 0.0
        %1032 = vmatpush1.msra.mxu0 0.0
        %1033 = vmatprep.mubr.f32.mxu0 0.0
        %1034 = vmatmul.mubr.f32.gmra.mrb[0].mxu0 %v967
        %v1035 = vpop.f32.mrb[0].mxu0
        %v1036 = vadd.f32 0.0, %v1035
        %v1037 = vpop.f32.mrb[0].mxu0
        %v1038 = vadd.f32 0.0, %v1037
        %1039 = vdwg.mxu0
        %v1040 = vmul.f32 %v1036, 0.015625
        %v1041 = vmul.f32 %v1038, 0.015625
        %v1042 = vld [vmem:[%s365] sm:$0x3]
        %v1043 = vadd.f32 %v1040, 1e-05
        %v1044 = vadd.f32 %v1041, 1e-05
        %v1045 = vrsqrt.pop %v1043
        %v1046 = vrsqrt.pop %v1044
        %v1049 = vcombine.low %v1045, %v1046
        %v1051 = vunpack.c.l.s4 1966171168
        %v1052 = vunpack.c.0.s8 %v1051
        %v1053 = vlaneseq
        %v1054 = vshrl.u32 %v1053, 7
        %v1055 = vsub.s32 %v1052, %v1054
        %v1056 = vrot.slane %v1049, %v1055
        %v1058 = vunpack.c.l.s4 1966171168
        %v1059 = vunpack.c.0.s8 %v1058
        %v1060 = vlaneseq
        %v1061 = vshrl.u32 %v1060, 7
        %v1062 = vsub.s32 %v1059, %v1061
        %v1063 = vrot.slane %v1056, %v1062
        %v1065 = vmul.f32 %v1042, %v1063
        %v1067 = vlaneseq
        %v1068 = vshrl.u32 %v1067, 7
        %v1069 = vsub.s32 0, %v1068
        %v1070 = vrot.slane %v1065, %v1069
        %v1071 = vlaneseq
        %v1072 = vshrl.u32 %v1071, 7
        %v1073 = vsub.s32 1, %v1072
        %v1074 = vrot.slane %v1065, %v1073
        %v1077 = vmul.f32 %v933, %v1070
        %v1078 = vmul.f32 %v934, %v1074
        %v1079 = vmul.f32 %v935, %v1070
        %v1080 = vmul.f32 %v936, %v1074
        %v1081 = vmul.f32 %v937, %v1070
        %v1082 = vmul.f32 %v938, %v1074
        %v1083 = vmul.f32 %v939, %v1070
        %v1084 = vmul.f32 %v940, %v1074
        %v1085 = vmul.f32 %v941, %v1070
        %v1086 = vmul.f32 %v942, %v1074
        %v1087 = vmul.f32 %v943, %v1070
        %v1088 = vmul.f32 %v944, %v1074
        %v1089 = vmul.f32 %v945, %v1070
        %v1090 = vmul.f32 %v946, %v1074
        %v1091 = vmul.f32 %v947, %v1070
        %v1092 = vmul.f32 %v948, %v1074
        %v1093 = vld [vmem:[%s370] sm:$0x3]
        %v1095 = vlaneseq
        %v1096 = vshrl.u32 %v1095, 7
        %v1097 = vsub.s32 0, %v1096
        %v1098 = vrot.slane %v1093, %v1097
        %v1099 = vlaneseq
        %v1100 = vshrl.u32 %v1099, 7
        %v1101 = vsub.s32 1, %v1100
        %v1102 = vrot.slane %v1093, %v1101
        %v1105 = vadd.f32 %v1077, %v1098
        %v1106 = vadd.f32 %v1078, %v1102
        %v1107 = vadd.f32 %v1079, %v1098
        %v1108 = vadd.f32 %v1080, %v1102
        %v1109 = vadd.f32 %v1081, %v1098
        %v1110 = vadd.f32 %v1082, %v1102
        %v1111 = vadd.f32 %v1083, %v1098
        %v1112 = vadd.f32 %v1084, %v1102
        %v1113 = vadd.f32 %v1085, %v1098
        %v1114 = vadd.f32 %v1086, %v1102
        %v1115 = vadd.f32 %v1087, %v1098
        %v1116 = vadd.f32 %v1088, %v1102
        %v1117 = vadd.f32 %v1089, %v1098
        %v1118 = vadd.f32 %v1090, %v1102
        %v1119 = vadd.f32 %v1091, %v1098
        %v1120 = vadd.f32 %v1092, %v1102
        %v1121 = vld [vmem:[%s309] sm:$0xff]
        %v1122 = vld [vmem:[%s309 + $0x8] sm:$0xff]
        %v1123 = vld [vmem:[%s309 + $0x10] sm:$0xff]
        %v1124 = vld [vmem:[%s309 + $0x18] sm:$0xff]
        %v1125 = vld [vmem:[%s309 + $0x20] sm:$0xff]
        %v1126 = vld [vmem:[%s309 + $0x28] sm:$0xff]
        %v1127 = vld [vmem:[%s309 + $0x30] sm:$0xff]
        %v1128 = vld [vmem:[%s309 + $0x38] sm:$0xff]
        %v1129 = vld [vmem:[%s309 + $0x40] sm:$0xff]
        %v1130 = vld [vmem:[%s309 + $0x48] sm:$0xff]
        %v1131 = vld [vmem:[%s309 + $0x50] sm:$0xff]
        %v1132 = vld [vmem:[%s309 + $0x58] sm:$0xff]
        %v1133 = vld [vmem:[%s309 + $0x60] sm:$0xff]
        %v1134 = vld [vmem:[%s309 + $0x68] sm:$0xff]
        %v1135 = vld [vmem:[%s309 + $0x70] sm:$0xff]
        %v1136 = vld [vmem:[%s309 + $0x78] sm:$0xff]
        %v1137 = vmax.f32 %v1105, 0.0
        %v1138 = vmax.f32 %v1106, 0.0
        %v1139 = vmax.f32 %v1107, 0.0
        %v1140 = vmax.f32 %v1108, 0.0
        %v1141 = vmax.f32 %v1109, 0.0
        %v1142 = vmax.f32 %v1110, 0.0
        %v1143 = vmax.f32 %v1111, 0.0
        %v1144 = vmax.f32 %v1112, 0.0
        %v1145 = vmax.f32 %v1113, 0.0
        %v1146 = vmax.f32 %v1114, 0.0
        %v1147 = vmax.f32 %v1115, 0.0
        %v1148 = vmax.f32 %v1116, 0.0
        %v1149 = vmax.f32 %v1117, 0.0
        %v1150 = vmax.f32 %v1118, 0.0
        %v1151 = vmax.f32 %v1119, 0.0
        %v1152 = vmax.f32 %v1120, 0.0
        %v1153 = vadd.f32 %v1121, %v1137
        %v1154 = vadd.f32 %v1122, %v1138
        %v1155 = vadd.f32 %v1123, %v1139
        %v1156 = vadd.f32 %v1124, %v1140
        %v1157 = vadd.f32 %v1125, %v1141
        %v1158 = vadd.f32 %v1126, %v1142
        %v1159 = vadd.f32 %v1127, %v1143
        %v1160 = vadd.f32 %v1128, %v1144
        %v1161 = vadd.f32 %v1129, %v1145
        %v1162 = vadd.f32 %v1130, %v1146
        %v1163 = vadd.f32 %v1131, %v1147
        %v1164 = vadd.f32 %v1132, %v1148
        %v1165 = vadd.f32 %v1133, %v1149
        %v1166 = vadd.f32 %v1134, %v1150
        %v1167 = vadd.f32 %v1135, %v1151
        %v1168 = vadd.f32 %v1136, %v1152
        %1169 = vst [vmem:[%s359] sm:$0xff] %v1153
        %1170 = vst [vmem:[%s359 + $0x8] sm:$0xff] %v1154
        %1171 = vst [vmem:[%s359 + $0x10] sm:$0xff] %v1155
        %1172 = vst [vmem:[%s359 + $0x18] sm:$0xff] %v1156
        %1173 = vst [vmem:[%s359 + $0x20] sm:$0xff] %v1157
        %1174 = vst [vmem:[%s359 + $0x28] sm:$0xff] %v1158
        %1175 = vst [vmem:[%s359 + $0x30] sm:$0xff] %v1159
        %1176 = vst [vmem:[%s359 + $0x38] sm:$0xff] %v1160
        %1177 = vst [vmem:[%s359 + $0x40] sm:$0xff] %v1161
        %1178 = vst [vmem:[%s359 + $0x48] sm:$0xff] %v1162
        %1179 = vst [vmem:[%s359 + $0x50] sm:$0xff] %v1163
        %1180 = vst [vmem:[%s359 + $0x58] sm:$0xff] %v1164
        %1181 = vst [vmem:[%s359 + $0x60] sm:$0xff] %v1165
        %1182 = vst [vmem:[%s359 + $0x68] sm:$0xff] %v1166
        %1183 = vst [vmem:[%s359 + $0x70] sm:$0xff] %v1167
        %1184 = vst [vmem:[%s359 + $0x78] sm:$0xff] %v1168
        %s1185 = sand.u32 %s176, 1
        %s1186 = scalar_lea.sflag [#allocation4], %s1185
        %s1187 = sand.u32 %s176, 1
        %s1188 = smul.addr %s1187, 128
        %s1189 = scalar_lea.vmem [#allocation9], %s1188
        // Predicated region
        $region61: #{tpu_custom_call.1} parent=43 // pred_check
          %p1190 = pneg %p186
        $region62: #{tpu_custom_call.1} parent=43 // pred_check_branch
          %1192 = sbr.rel (%p1190) target = $region64
        $region63: #{tpu_custom_call.1} parent=43 // pred_region
          %s1193 = smul.u32 2, %s22
          %s1195 = ssub.s32 2048, 2048
          %1196 = vsyncadd %s1186, %s1195
          %s1197 = smul.addr %s1193, 128
          %s1198 = scalar_lea.hbm %s6, %s1197
          %s1199 = sshll.u32 %s1189, 4
          %s1200 = int_to_ptr.vmem [resolvable:$true] %s1199
          %1205 = dma.vmem_to_hbm [thread:$0]  %s1200, 2048, %s1198, %s1186, 256, 512, 16
        $region64: #{tpu_custom_call.1} parent=43 // pred_fallthru
          _
      $region44: #{tpu_custom_call.1} parent=5 // pred_fallthru
        _
      %p1206 = scmp.le.s32.totalorder 2, %s17
      // Predicated region
      $region65: #{tpu_custom_call.1} parent=5 // pred_check
        %p1207 = pneg %p1206
      $region66: #{tpu_custom_call.1} parent=5 // pred_check_branch
        %1209 = sbr.rel (%p1207) target = $region68
      $region67: #{tpu_custom_call.1} parent=5 // pred_region
        %s1210 = ssub.s32 %s17, 2
        // Predicated region
        $region69: #{tpu_custom_call.1} parent=67 // pred_check
          %p1211 = pneg %p192
        $region70: #{tpu_custom_call.1} parent=67 // pred_check_branch
          %1213 = sbr.rel (%p1211) target = $region72
        $region71: #{tpu_custom_call.1} parent=67 // pred_region
          %s1214 = sand.u32 %s177, 1
          %s1215 = scalar_lea.sflag [#allocation4], %s1214
          %s1216 = sand.u32 %s177, 1
          %s1217 = smul.addr %s1216, 128
          %s1218 = scalar_lea.vmem [#allocation9], %s1217
          %1219 = dma.done %s1215, 2048
        $region72: #{tpu_custom_call.1} parent=67 // pred_fallthru
          _
      $region68: #{tpu_custom_call.1} parent=5 // pred_fallthru
        _
    $region6: #{tpu_custom_call.1} parent=1 // loop_footer
      %s21 = sadd.s32 1, %s17
    $region7: #{tpu_custom_call.1} parent=1 // loop_footer_branch
      %16 = sbr.rel target = $region3
    $region8: #{tpu_custom_call.1} parent=1 // loop_exit
      _
    %1220 = vsyncpa [#allocation3], 1
    %s1221 = scalar_lea.sflag [#allocation3], 1
    %1222 = vsyncpa %s1221, 1
    %1223 = vsyncpa [#allocation6], 1
    %1224 = vsyncpa [#allocation4], 1
    %s1225 = scalar_lea.sflag [#allocation4], 1
    %1226 = vsyncpa %s1225, 1

</llo_original>
